<compile_context>
chip_gen: v7x
topology: tpu7x:2x2x1
jax: 0.10.0
libtpu: 0.0.40
codegen_flags: <defaults>
</compile_context>

<pallas_src>
import functools

import jax
import jax.numpy as jnp
from jax.experimental import pallas as pl
from jax.experimental.pallas import tpu as pltpu


def _round_up(x, m):
    return ((x + m - 1) // m) * m


# ---------------------------------------------------------------------------
# Kernel 1 (fused): UNet head post-processing + SAM image normalization
#   boundary  = 1 - 0.5*(sigmoid(b0) + sigmoid(b1))
#   pred_mask = argmax(out_binary_seg, dim=1)        (== argmax of softmax)
#   frag_in   = boundary * (pred_mask == 0)
#   sam_x     = clip((x*(mx-mn)+mn) * 255/max_y, 0, 255) -> uint8
#             = clip(x*a + b', 0, 255)                   (a, b' precomputed)
# ---------------------------------------------------------------------------
def _post_norm_kernel(scalars_ref, bnd_ref, seg_ref, x_ref,
                      boundary_out, mask_out, frag_out, sam_u8_out):
    a = scalars_ref[0]           # (mx - mn) * 255 / max_y
    b = scalars_ref[1]           # mn * 255 / max_y

    b0 = jax.nn.sigmoid(bnd_ref[0])
    b1 = jax.nn.sigmoid(bnd_ref[1])
    boundary = 1.0 - 0.5 * (b0 + b1)
    boundary_out[...] = boundary

    # argmax over the 2 classes: softmax is monotone, compare logits directly.
    pos = seg_ref[1] > seg_ref[0]
    mask_out[...] = pos.astype(jnp.int32).astype(jnp.uint8)
    frag_out[...] = jnp.where(pos, 0.0, boundary)

    # Single fused multiply-add, clip, then f32 -> i32 -> u8 (deterministic).
    y = jnp.clip(x_ref[...] * a + b, 0.0, 255.0)
    sam_u8_out[...] = y.astype(jnp.int32).astype(jnp.uint8)


def unet_post_and_sam(out_boundary0, out_binary_seg0, x00, imgs_min, imgs_max):
    H, W = x00.shape
    mn = imgs_min[0].astype(jnp.float32)
    mx = imgs_max[0].astype(jnp.float32)

    # Affine max hoist: y = x*(mx-mn)+mn with (mx-mn) > 0 => max(y) = max(x)*(mx-mn)+mn.
    max_y = jnp.max(x00) * (mx - mn) + mn
    scale = 255.0 / jnp.maximum(max_y, 1e-6)       # guard max_y <= 0
    a = (mx - mn) * scale
    bprime = mn * scale
    scalars = jnp.stack([a, bprime]).astype(jnp.float32)

    # Lane-dense layout: when W < 128, flatten (H, W) -> (R, 128) so all four
    # outputs get unmasked 128-lane stores (biggest measured single lever).
    if W < 128 and (H * W) % 128 == 0:
        R, L = (H * W) // 128, 128
    else:
        R, L = H, W
    bnd = out_boundary0.reshape(2, R, L)
    seg = out_binary_seg0.reshape(2, R, L)
    x2 = x00.reshape(R, L)

    # Row tile: multiple of 32 (uint8 outputs), grid >= 2 whenever R > 32 so
    # the "parallel" axis shards across v7x's 2 TensorCores; VMEM-budgeted
    # (~30 B/row/lane * 2 buffers <= ~24 MiB) so it is safe on 64 MiB v7x.
    if R <= 32:
        th = R
    else:
        bytes_per_row = 30 * L                       # ~5 f32 in + 2 f32 + 2 u8 out
        th_budget = max(32, (24 * 1024 * 1024) // (2 * bytes_per_row))
        th_budget = (th_budget // 32) * 32
        th = min(_round_up(pl.cdiv(R, 2), 32), 256, th_budget)
        th = max(th, 32)
    grid = (pl.cdiv(R, th),)

    grid_spec = pltpu.PrefetchScalarGridSpec(
        num_scalar_prefetch=1,
        grid=grid,
        in_specs=[
            pl.BlockSpec((2, th, L), lambda i, s: (0, i, 0)),
            pl.BlockSpec((2, th, L), lambda i, s: (0, i, 0)),
            pl.BlockSpec((th, L), lambda i, s: (i, 0)),
        ],
        out_specs=[
            pl.BlockSpec((th, L), lambda i, s: (i, 0)),
            pl.BlockSpec((th, L), lambda i, s: (i, 0)),
            pl.BlockSpec((th, L), lambda i, s: (i, 0)),
            pl.BlockSpec((th, L), lambda i, s: (i, 0)),
        ],
    )
    boundary, pred_mask, frag_in, sam_u8 = pl.pallas_call(
        _post_norm_kernel,
        out_shape=(
            jax.ShapeDtypeStruct((R, L), jnp.float32),   # boundary
            jax.ShapeDtypeStruct((R, L), jnp.uint8),     # pred_mask
            jax.ShapeDtypeStruct((R, L), jnp.float32),   # gen_fragment input
            jax.ShapeDtypeStruct((R, L), jnp.uint8),     # sam_x (already uint8)
        ),
        grid_spec=grid_spec,
        compiler_params=pltpu.CompilerParams(
            dimension_semantics=("parallel",),
            vmem_limit_bytes=32 * 1024 * 1024,
        ),
    )(scalars, bnd, seg, x2)
    return (boundary.reshape(H, W), pred_mask.reshape(H, W),
            frag_in.reshape(H, W), sam_u8.reshape(H, W))


# ---------------------------------------------------------------------------
# Kernel 2: nn.Conv2d(256, 32, kernel_size=1)  ==  (32,256) @ (256, H*W) + bias
# Small HW (post-commute embedding): plain jnp.dot — a Pallas launch would
# cost more than the ~0.5 MFLOP of compute and XLA fuses it with the resize.
# Large HW: Pallas MXU path with bf16 operands (halves HBM traffic on the
# dominant (256, HW) stream), lane-dense (Cout, tile) output.
# ---------------------------------------------------------------------------
def _conv1x1_kernel(w_ref, b_ref, x_ref, out_ref):
    out_ref[...] = (jnp.dot(w_ref[...], x_ref[...],
                            preferred_element_type=jnp.float32)
                    + b_ref[...])


def conv1x1(x_nchw, w, b, tn=4096):
    B, Cin, H, W = x_nchw.shape
    assert B == 1
    Cout = w.shape[0]
    HW = H * W
    x2d = x_nchw.reshape(Cin, HW)

    if HW <= 4096:
        out = jnp.dot(w, x2d, preferred_element_type=jnp.float32) + b[:, None]
        return out.reshape(1, Cout, H, W)

    w_bf = w.astype(jnp.bfloat16)
    x_bf = x2d.astype(jnp.bfloat16)
    b2d = b.reshape(Cout, 1).astype(jnp.float32)

    tile = min(tn, HW)
    grid = (pl.cdiv(HW, tile),)
    out = pl.pallas_call(
        _conv1x1_kernel,
        out_shape=jax.ShapeDtypeStruct((Cout, HW), jnp.float32),
        grid=grid,
        in_specs=[pl.BlockSpec((Cout, Cin), lambda j: (0, 0)),
                  pl.BlockSpec((Cout, 1), lambda j: (0, 0)),
                  pl.BlockSpec((Cin, tile), lambda j: (0, j))],
        out_specs=pl.BlockSpec((Cout, tile), lambda j: (0, j)),
        compiler_params=pltpu.CompilerParams(
            dimension_semantics=("parallel",),
            vmem_limit_bytes=32 * 1024 * 1024,
        ),
    )(w_bf, b2d, x_bf)
    return out.reshape(1, Cout, H, W)


# ---------------------------------------------------------------------------
# Parameters (deterministic, synthetic)
# ---------------------------------------------------------------------------
def init_params(key):
    kw, kb = jax.random.split(key)
    conv_w = jax.random.normal(kw, (32, 256), jnp.float32) * 0.02   # Conv2d(256,32,1)
    conv_b = jax.random.normal(kb, (32,), jnp.float32) * 0.02
    return {"conv_w": conv_w, "conv_b": conv_b}


# ---------------------------------------------------------------------------
# Forward pass (mode='training' path: no [92:-92, 4:-4] crop, so small shapes work)
# ---------------------------------------------------------------------------
def unet_egnn_forward(x, imgs_min, imgs_max, params):
    B, C, H, W = x.shape
    key = jax.random.PRNGKey(42)
    ks = jax.random.split(key, 6)

    # TODO(synk): ResidualUNet2D definition not provided; its four outputs are
    # synthesized deterministically here as stand-ins for the rest of the forward.
    out_boundary = jax.random.normal(ks[0], (B, 2, H, W), jnp.float32)
    out_emb = jax.random.normal(ks[1], (B, 16, H, W), jnp.float32)
    out_binary_seg = jax.random.normal(ks[2], (B, 2, H, W), jnp.float32)
    spix4 = jax.random.normal(ks[3], (B, 32, H, W), jnp.float32)

    # Fused: boundary / pred_mask / fragment input / SAM-normalized uint8 image.
    boundary, pred_mask, frag_input, sam_u8 = unet_post_and_sam(
        out_boundary[0], out_binary_seg[0], x[0, 0], imgs_min, imgs_max)
    # TODO(synk): gen_fragment / remove_samll_object / np.unique relabeling are
    # data-dependent CPU algorithms (watershed / connected components) with no Pallas equivalent.

    # TODO(synk): cv2.cvtColor(BGR2RGB) on a grayscale slice; replicate to 3 channels instead.
    sam_rgb = jnp.stack([sam_u8, sam_u8, sam_u8], axis=-1)

    # TODO(synk): SAM ViT-H image encoder requires an external checkpoint; embedding synthesized.
    image_embedding = jax.random.normal(ks[4], (1, 256, 8, 8), jnp.float32)

    # Commute the (linear) 1x1 conv with the (linear) bicubic upsample:
    # conv on the small (1,256,8,8) embedding, then resize the (1,32,8,8)
    # result.  Bicubic weights sum to 1, so the bias term is preserved exactly,
    # and the resized/streamed tensor shrinks 8x (256 -> 32 channels).
    sam_emb_small = conv1x1(image_embedding, params["conv_w"], params["conv_b"])  # (1,32,8,8)
    # glue: F.interpolate(mode='bicubic', align_corners=False) ~ jax.image.resize 'cubic'
    sam_embedding = jax.image.resize(sam_emb_small, (1, 32, H, W), method="cubic")

    # TODO(synk): Segments2RAG not provided; do NOT materialize the 80-channel
    # concat (largest HBM stream in this glue) — pass the three maps separately.
    node_input_parts = (out_emb, spix4, sam_embedding)

    # TODO(synk): Segments2RAG / cython_utils.get_adj not provided; adjacency and
    # boundary statistics synthesized deterministically for the edge-feature math.
    N = 64
    adj = (jax.random.uniform(ks[5], (N, N)) > 0.7).astype(jnp.float32)
    adj = jnp.maximum(adj, adj.T) * (1.0 - jnp.eye(N, dtype=jnp.float32))
    adj_num_raw = jax.random.uniform(jax.random.PRNGKey(7), (N, N)) * 10.0 + 1.0
    adj_int_raw = jax.random.uniform(jax.random.PRNGKey(8), (N, N)) * 255.0

    # Edge features in plain jnp (arrays are ~16 KiB; a Pallas launch costs more
    # than the work).  Reuse the adj*adj_int product: adj*(1-a) = adj - adj*a.
    adj_num = adj_num_raw / jnp.max(adj_num_raw)
    adj_int = adj_int_raw * (1.0 / 255.0)
    adj_boundary = jnp.stack([adj_int, adj_num])               # (2, N, N)
    edge_neg = adj * adj_int                                   # edge_feat_neg
    edge_feat_all = jnp.stack([edge_neg, adj - edge_neg])      # (2, N, N)

    # TODO(synk): GraphNetwork (egnn), compute_cosine_similarity_histogram and
    # compute_SAM_iou definitions are not provided; graph message passing not implemented.
    sam_img = sam_rgb[:, :, 0].astype(jnp.float32)

    return dict(out_boundary=out_boundary, out_emb=out_emb,
                out_binary_seg=out_binary_seg, boundary=boundary,
                pred_mask=pred_mask, frag_input=frag_input, sam_x=sam_u8,
                SAM_embedding=sam_embedding, node_input_parts=node_input_parts,
                adj=adj, adj_boundary=adj_boundary,
                edge_feat_all=edge_feat_all, sam_img=sam_img)


if __name__ == "__main__":
    key = jax.random.PRNGKey(0)
    kx, kp = jax.random.split(key)
    x = jax.random.uniform(kx, (1, 1, 32, 32), jnp.float32)
    imgs_min = jnp.array([10.0], jnp.float32)
    imgs_max = jnp.array([250.0], jnp.float32)
    params = init_params(kp)

    outs = unet_egnn_forward(x, imgs_min, imgs_max, params)
    jax.block_until_ready(outs)
    print("KERNEL_OK")
</pallas_src>

<mosaic_0001>
module attributes {stable_mosaic.version = 11 : i64} {
  func.func @_post_norm_kernel(%arg0: i32, %arg1: memref<2xf32, #tpu.memory_space<smem>>, %arg2: memref<2x8x128xf32, #tpu.memory_space<vmem>>, %arg3: memref<2x8x128xf32, #tpu.memory_space<vmem>>, %arg4: memref<8x128xf32, #tpu.memory_space<vmem>>, %arg5: memref<8x128xf32, #tpu.memory_space<vmem>>, %arg6: memref<8x128xi8, #tpu.memory_space<vmem>>, %arg7: memref<8x128xf32, #tpu.memory_space<vmem>>, %arg8: memref<8x128xi8, #tpu.memory_space<vmem>>) attributes {dimension_semantics = [#tpu.dimension_semantics<parallel>], iteration_bounds = array<i64: 1>, scalar_prefetch = 1 : i64, scratch_operands = 0 : i64, tpu.core_type = #tpu.core_type<tc>, window_params = [{transform_indices = @transform_0, window_bounds = array<i64: 2, 8, 128>}, {transform_indices = @transform_1, window_bounds = array<i64: 2, 8, 128>}, {transform_indices = @transform_2, window_bounds = array<i64: 8, 128>}, {transform_indices = @transform_3, window_bounds = array<i64: 8, 128>}, {transform_indices = @transform_4, window_bounds = array<i64: 8, 128>}, {transform_indices = @transform_5, window_bounds = array<i64: 8, 128>}, {transform_indices = @transform_6, window_bounds = array<i64: 8, 128>}]} {
    %c0 = arith.constant 0 : index
    %0 = memref.load %arg1[%c0] : memref<2xf32, #tpu.memory_space<smem>>
    %c1 = arith.constant 1 : index
    %1 = memref.load %arg1[%c1] : memref<2xf32, #tpu.memory_space<smem>>
    %c0_0 = arith.constant 0 : index
    %c0_1 = arith.constant 0 : index
    %c0_2 = arith.constant 0 : index
    %2 = vector.load %arg2[%c0_0, %c0_1, %c0_2] : memref<2x8x128xf32, #tpu.memory_space<vmem>>, vector<1x8x128xf32>
    %3 = vector.shape_cast %2 : vector<1x8x128xf32> to vector<8x128xf32>
    %4 = arith.negf %3 : vector<8x128xf32>
    %5 = math.exp %4 : vector<8x128xf32>
    %cst = arith.constant 1.000000e+00 : f32
    %6 = vector.broadcast %cst : f32 to vector<8x128xf32>
    %7 = arith.addf %6, %5 : vector<8x128xf32>
    %8 = arith.divf %6, %7 : vector<8x128xf32>
    %c1_3 = arith.constant 1 : index
    %c0_4 = arith.constant 0 : index
    %c0_5 = arith.constant 0 : index
    %9 = vector.load %arg2[%c1_3, %c0_4, %c0_5] : memref<2x8x128xf32, #tpu.memory_space<vmem>>, vector<1x8x128xf32>
    %10 = vector.shape_cast %9 : vector<1x8x128xf32> to vector<8x128xf32>
    %11 = arith.negf %10 : vector<8x128xf32>
    %12 = math.exp %11 : vector<8x128xf32>
    %cst_6 = arith.constant 1.000000e+00 : f32
    %13 = vector.broadcast %cst_6 : f32 to vector<8x128xf32>
    %14 = arith.addf %13, %12 : vector<8x128xf32>
    %15 = arith.divf %13, %14 : vector<8x128xf32>
    %16 = arith.addf %8, %15 : vector<8x128xf32>
    %cst_7 = arith.constant 5.000000e-01 : f32
    %17 = vector.broadcast %cst_7 : f32 to vector<8x128xf32>
    %18 = arith.mulf %17, %16 : vector<8x128xf32>
    %cst_8 = arith.constant 1.000000e+00 : f32
    %19 = vector.broadcast %cst_8 : f32 to vector<8x128xf32>
    %20 = arith.subf %19, %18 : vector<8x128xf32>
    %c0_9 = arith.constant 0 : index
    %c0_10 = arith.constant 0 : index
    %21 = vector.load %arg5[%c0_9, %c0_10] : memref<8x128xf32, #tpu.memory_space<vmem>>, vector<8x128xf32>
    tpu.vector_store %arg5[%c0_9, %c0_10], %20 {strides = array<i32>} : memref<8x128xf32, #tpu.memory_space<vmem>>, vector<8x128xf32>,
    %c1_11 = arith.constant 1 : index
    %c0_12 = arith.constant 0 : index
    %c0_13 = arith.constant 0 : index
    %22 = vector.load %arg3[%c1_11, %c0_12, %c0_13] : memref<2x8x128xf32, #tpu.memory_space<vmem>>, vector<1x8x128xf32>
    %23 = vector.shape_cast %22 : vector<1x8x128xf32> to vector<8x128xf32>
    %c0_14 = arith.constant 0 : index
    %c0_15 = arith.constant 0 : index
    %c0_16 = arith.constant 0 : index
    %24 = vector.load %arg3[%c0_14, %c0_15, %c0_16] : memref<2x8x128xf32, #tpu.memory_space<vmem>>, vector<1x8x128xf32>
    %25 = vector.shape_cast %24 : vector<1x8x128xf32> to vector<8x128xf32>
    %26 = arith.cmpf ogt, %23, %25 : vector<8x128xf32>
    %27 = arith.extui %26 : vector<8x128xi1> to vector<8x128xi32>
    %28 = arith.trunci %27 : vector<8x128xi32> to vector<8x128xi8>
    %c0_17 = arith.constant 0 : index
    %c0_18 = arith.constant 0 : index
    %29 = vector.load %arg6[%c0_17, %c0_18] : memref<8x128xi8, #tpu.memory_space<vmem>>, vector<8x128xi8>
    tpu.vector_store %arg6[%c0_17, %c0_18], %28 {strides = array<i32>} : memref<8x128xi8, #tpu.memory_space<vmem>>, vector<8x128xi8>,
    %cst_19 = arith.constant 0.000000e+00 : f32
    %30 = vector.broadcast %cst_19 : f32 to vector<8x128xf32>
    %31 = arith.select %26, %30, %20 : vector<8x128xi1>, vector<8x128xf32>
    %c0_20 = arith.constant 0 : index
    %c0_21 = arith.constant 0 : index
    %32 = vector.load %arg7[%c0_20, %c0_21] : memref<8x128xf32, #tpu.memory_space<vmem>>, vector<8x128xf32>
    tpu.vector_store %arg7[%c0_20, %c0_21], %31 {strides = array<i32>} : memref<8x128xf32, #tpu.memory_space<vmem>>, vector<8x128xf32>,
    %c0_22 = arith.constant 0 : index
    %c0_23 = arith.constant 0 : index
    %33 = vector.load %arg4[%c0_22, %c0_23] : memref<8x128xf32, #tpu.memory_space<vmem>>, vector<8x128xf32>
    %34 = vector.broadcast %0 : f32 to vector<8x128xf32>
    %35 = arith.mulf %33, %34 : vector<8x128xf32>
    %36 = vector.broadcast %1 : f32 to vector<8x128xf32>
    %37 = arith.addf %35, %36 : vector<8x128xf32>
    %cst_24 = arith.constant 0.000000e+00 : f32
    %cst_25 = arith.constant 2.550000e+02 : f32
    %38 = vector.broadcast %cst_24 : f32 to vector<8x128xf32>
    %39 = arith.maximumf %38, %37 : vector<8x128xf32>
    %40 = vector.broadcast %cst_25 : f32 to vector<8x128xf32>
    %41 = arith.minimumf %40, %39 : vector<8x128xf32>
    %42 = arith.fptosi %41 : vector<8x128xf32> to vector<8x128xi32>
    %43 = arith.trunci %42 : vector<8x128xi32> to vector<8x128xi8>
    %c0_26 = arith.constant 0 : index
    %c0_27 = arith.constant 0 : index
    %44 = vector.load %arg8[%c0_26, %c0_27] : memref<8x128xi8, #tpu.memory_space<vmem>>, vector<8x128xi8>
    tpu.vector_store %arg8[%c0_26, %c0_27], %43 {strides = array<i32>} : memref<8x128xi8, #tpu.memory_space<vmem>>, vector<8x128xi8>,
    return
  }
  func.func @transform_0(%arg0: i32, %arg1: memref<2xf32, #tpu.memory_space<smem>>) -> (i32, i32, i32) {
    %c0_i32 = arith.constant 0 : i32
    %c0_i32_0 = arith.constant 0 : i32
    %c0_i32_1 = arith.constant 0 : i32
    return %c0_i32, %arg0, %c0_i32_0 : i32, i32, i32
  }
  func.func @transform_1(%arg0: i32, %arg1: memref<2xf32, #tpu.memory_space<smem>>) -> (i32, i32, i32) {
    %c0_i32 = arith.constant 0 : i32
    %c0_i32_0 = arith.constant 0 : i32
    %c0_i32_1 = arith.constant 0 : i32
    return %c0_i32, %arg0, %c0_i32_0 : i32, i32, i32
  }
  func.func @transform_2(%arg0: i32, %arg1: memref<2xf32, #tpu.memory_space<smem>>) -> (i32, i32) {
    %c0_i32 = arith.constant 0 : i32
    %c0_i32_0 = arith.constant 0 : i32
    return %arg0, %c0_i32 : i32, i32
  }
  func.func @transform_3(%arg0: i32, %arg1: memref<2xf32, #tpu.memory_space<smem>>) -> (i32, i32) {
    %c0_i32 = arith.constant 0 : i32
    %c0_i32_0 = arith.constant 0 : i32
    return %arg0, %c0_i32 : i32, i32
  }
  func.func @transform_4(%arg0: i32, %arg1: memref<2xf32, #tpu.memory_space<smem>>) -> (i32, i32) {
    %c0_i32 = arith.constant 0 : i32
    %c0_i32_0 = arith.constant 0 : i32
    return %arg0, %c0_i32 : i32, i32
  }
  func.func @transform_5(%arg0: i32, %arg1: memref<2xf32, #tpu.memory_space<smem>>) -> (i32, i32) {
    %c0_i32 = arith.constant 0 : i32
    %c0_i32_0 = arith.constant 0 : i32
    return %arg0, %c0_i32 : i32, i32
  }
  func.func @transform_6(%arg0: i32, %arg1: memref<2xf32, #tpu.memory_space<smem>>) -> (i32, i32) {
    %c0_i32 = arith.constant 0 : i32
    %c0_i32_0 = arith.constant 0 : i32
    return %arg0, %c0_i32 : i32, i32
  }
}

</mosaic_0001>

<llo_original>
// kernel: tpu_custom_call.1
$region0: #{tpu_custom_call.1}
  #allocation0 [shape = 'u32[]', space=smem, size = 0x4, offset = 0x4, fixed_abs, tag = 'smem constant byte address 0x4 - core index']
  #allocation1 [shape = 'u32[144,128]{1,0:T(1,128)}', space=vmem, size = 0x12000, scoped, tag = 'internal scratch']
  #allocation2 [shape = 's32[1]{0}', space=sflag, size = 0x4, scoped, tag = 'scoped memory for tpu_custom_call.1']
  #allocation3 [shape = 'u8[512]{0}', space=smem, size = 0x200, scoped, tag = 'prefetched SMEM operand 0']
  %s0 = inlined_call_operand.hbm [shape: f32[2], index: 0, kind: input, shape index: {}]
  %s1 = inlined_call_operand.hbm [shape: f32[2,8,128], index: 1, kind: input, shape index: {}]
  %s2 = inlined_call_operand.hbm [shape: f32[2,8,128], index: 2, kind: input, shape index: {}]
  %s3 = inlined_call_operand.vmem [shape: f32[8,128], index: 3, kind: input, shape index: {}]
  %s4 = inlined_call_operand.hbm [shape: f32[8,128], index: 4, kind: output, shape index: {0}]
  %s5 = inlined_call_operand.hbm [shape: u8[8,128], index: 5, kind: output, shape index: {1}]
  %s6 = inlined_call_operand.hbm [shape: f32[8,128], index: 6, kind: output, shape index: {2}]
  %s7 = inlined_call_operand.hbm [shape: u8[8,128], index: 7, kind: output, shape index: {3}]
  %8 = xla_tuple %s4, %s5, %s6, %s7
  %s9 = sld [smem:[#allocation0]]
  $region54: #{tpu_custom_call.1} parent=0
    _
  %s11 = ssub.s32 1, %s9
  %s12 = scalar_select 0, %s11, %s9
  %14 = dma.hbm_to_smem %s0, 16, [#allocation3], [#allocation2]
  %15 = dma.done [#allocation2], 16
  %16 = sfence
  $region1: #{tpu_custom_call.1} parent=0
    #allocation4 [shape = 'u8[8192]{0}', space=vmem, size = 0x2000, scoped, tag = 'input window, operand 1, single buffered']
    #allocation5 [shape = 's32[1]{0}', space=sflag, size = 0x4, scoped, tag = 'scoped memory for tpu_custom_call.1']
    #allocation6 [shape = 's32[1]{0}', space=sflag, size = 0x4, scoped, tag = 'scoped memory for tpu_custom_call.1']
    #allocation7 [shape = 'u8[8192]{0}', space=vmem, size = 0x2000, scoped, tag = 'input window, operand 2, single buffered']
    #allocation8 [shape = 's32[1]{0}', space=sflag, size = 0x4, scoped, tag = 'scoped memory for tpu_custom_call.1']
    #allocation9 [shape = 'u8[4096]{0}', space=vmem, size = 0x1000, scoped, tag = 'output window, operand 0, single buffered']
    #allocation10 [shape = 'u8[1024]{0}', space=vmem, size = 0x400, scoped, tag = 'output window, operand 1, single buffered']
    #allocation11 [shape = 's32[1]{0}', space=sflag, size = 0x4, scoped, tag = 'scoped memory for tpu_custom_call.1']
    #allocation12 [shape = 'u8[4096]{0}', space=vmem, size = 0x1000, scoped, tag = 'output window, operand 2, single buffered']
    #allocation13 [shape = 'u8[1024]{0}', space=vmem, size = 0x400, scoped, tag = 'output window, operand 3, single buffered']
    #allocation14 [shape = 's32[1]{0}', space=sflag, size = 0x4, scoped, tag = 'scoped memory for tpu_custom_call.1']
    %17 = vsyncpa [#allocation5], 0
    %18 = vsyncpa [#allocation8], 0
    %19 = vsyncpa [#allocation6], 0
    %20 = vsyncpa [#allocation11], 0
    %21 = vsyncpa [#allocation14], 0
    // Predicated region
    $region2: #{tpu_custom_call.1} parent=1 // pred_check
      _
    $region3: #{tpu_custom_call.1} parent=1 // pred_check_branch
      %23 = sbr.rel (0) target = $region5
    $region4: #{tpu_custom_call.1} parent=1 // pred_region
      %s25 = ssub.s32 256, 256
      %26 = vsyncadd [#allocation5], %s25
      %s27 = sshll.u32 [#allocation4], 4
      %s28 = int_to_ptr.vmem [resolvable:$true] %s27
      %33 = dma.hbm_to_vmem [thread:$0]  %s1, 256, %s28, [#allocation5], 128, 128, 8
    $region5: #{tpu_custom_call.1} parent=1 // pred_fallthru
      _
    // Predicated region
    $region6: #{tpu_custom_call.1} parent=1 // pred_check
      _
    $region7: #{tpu_custom_call.1} parent=1 // pred_check_branch
      %35 = sbr.rel (0) target = $region9
    $region8: #{tpu_custom_call.1} parent=1 // pred_region
      %s37 = ssub.s32 256, 256
      %38 = vsyncadd [#allocation8], %s37
      %s39 = sshll.u32 [#allocation7], 4
      %s40 = int_to_ptr.vmem [resolvable:$true] %s39
      %45 = dma.hbm_to_vmem [thread:$0]  %s2, 256, %s40, [#allocation8], 128, 128, 8
    $region9: #{tpu_custom_call.1} parent=1 // pred_fallthru
      _
    // Predicated region
    $region10: #{tpu_custom_call.1} parent=1 // pred_check
      _
    $region11: #{tpu_custom_call.1} parent=1 // pred_check_branch
      %47 = sbr.rel (0) target = $region13
    $region12: #{tpu_custom_call.1} parent=1 // pred_region
      _
    $region13: #{tpu_custom_call.1} parent=1 // pred_fallthru
      _
    // Predicated region
    $region14: #{tpu_custom_call.1} parent=1 // pred_check
      _
    $region15: #{tpu_custom_call.1} parent=1 // pred_check_branch
      %49 = sbr.rel (0) target = $region17
    $region16: #{tpu_custom_call.1} parent=1 // pred_region
      %50 = dma.done [#allocation5], 256
    $region17: #{tpu_custom_call.1} parent=1 // pred_fallthru
      _
    // Predicated region
    $region18: #{tpu_custom_call.1} parent=1 // pred_check
      _
    $region19: #{tpu_custom_call.1} parent=1 // pred_check_branch
      %52 = sbr.rel (0) target = $region21
    $region20: #{tpu_custom_call.1} parent=1 // pred_region
      %53 = dma.done [#allocation8], 256
    $region21: #{tpu_custom_call.1} parent=1 // pred_fallthru
      _
    %s56 = sld [smem:[#allocation3]]
    %s57 = sld [smem:[#allocation3 + $0x1]]
    %v58 = vld [vmem:[#allocation4] sm:$0xff]
    %v59 = vxor.u32 %v58, 2147483648
    %v60 = vmul.f32 %v59, 1.442695
    %v61 = vpow.pop %v60
    %v62 = vadd.f32 %v61, 1.0
    %v63 = vrcp.pop %v62
    %v64 = vmul.f32 1.0, %v63
    %s65 = scalar_lea.vmem [#allocation4], 8
    %v66 = vld [vmem:[%s65] sm:$0xff]
    %v67 = vxor.u32 %v66, 2147483648
    %v68 = vmul.f32 %v67, 1.442695
    %v69 = vpow.pop %v68
    %v70 = vadd.f32 %v69, 1.0
    %v71 = vrcp.pop %v70
    %v72 = vmul.f32 1.0, %v71
    %v73 = vadd.f32 %v64, %v72
    %v74 = vmul.f32 %v73, 0.5
    %v75 = vsub.f32 1.0, %v74
    %76 = vst [vmem:[#allocation9] sm:$0xff] %v75
    %s77 = scalar_lea.vmem [#allocation7], 8
    %v78 = vld [vmem:[%s77] sm:$0xff]
    %v79 = vld [vmem:[#allocation7] sm:$0xff]
    %vm80 = vcmp.gt.f32.partialorder %v78, %v79
    %vm81 = vmpackc.low %vm80, %vm80
    %vm82 = vmpackc.even %vm81, %vm81
    %v83 = vsel %vm82, 16843009, 0
    %84 = vst [vmem:[#allocation10] sm:$0x3] %v83
    %v85 = vsel %vm80, 0.0, %v75
    %86 = vst [vmem:[#allocation12] sm:$0xff] %v85
    %v87 = vld [vmem:[%s3] sm:$0xff]
    %v88 = vstv %s56
    %v89 = vmul.f32 %v87, %v88
    %v90 = vstv %s57
    %v91 = vadd.f32 %v89, %v90
    %v92 = vmax.f32 %v91, 0.0
    %v93 = vmin.f32 %v92, 255.0
    %v94 = vcvt.f32.s32.to.zero.pseudo %v93
    %v95 = vpack.c.b16 %v94, %v94
    %v96 = vpack.c.b8 %v95, %v95
    %97 = vst [vmem:[#allocation13] sm:$0x3] %v96
    // Predicated region
    $region22: #{tpu_custom_call.1} parent=1 // pred_check
      _
    $region23: #{tpu_custom_call.1} parent=1 // pred_check_branch
      %99 = sbr.rel (0) target = $region25
    $region24: #{tpu_custom_call.1} parent=1 // pred_region
      %s101 = ssub.s32 128, 128
      %102 = vsyncadd [#allocation6], %s101
      %s104 = sshll.u32 [#allocation9], 4
      %s105 = int_to_ptr.vmem [resolvable:$true] %s104
      %107 = dma.vmem_to_hbm [thread:$0]  %s105, 128, %s4, [#allocation6]
    $region25: #{tpu_custom_call.1} parent=1 // pred_fallthru
      _
    // Predicated region
    $region26: #{tpu_custom_call.1} parent=1 // pred_check
      _
    $region27: #{tpu_custom_call.1} parent=1 // pred_check_branch
      %109 = sbr.rel (0) target = $region29
    $region28: #{tpu_custom_call.1} parent=1 // pred_region
      %s111 = ssub.s32 32, 32
      %112 = vsyncadd [#allocation11], %s111
      %s114 = sshll.u32 [#allocation10], 4
      %s115 = int_to_ptr.vmem [resolvable:$true] %s114
      %117 = dma.vmem_to_hbm [thread:$0]  %s115, 32, %s5, [#allocation11]
    $region29: #{tpu_custom_call.1} parent=1 // pred_fallthru
      _
    // Predicated region
    $region30: #{tpu_custom_call.1} parent=1 // pred_check
      _
    $region31: #{tpu_custom_call.1} parent=1 // pred_check_branch
      %119 = sbr.rel (0) target = $region33
    $region32: #{tpu_custom_call.1} parent=1 // pred_region
      %s121 = ssub.s32 128, 128
      %122 = vsyncadd [#allocation11], %s121
      %s124 = sshll.u32 [#allocation12], 4
      %s125 = int_to_ptr.vmem [resolvable:$true] %s124
      %127 = dma.vmem_to_hbm [thread:$0]  %s125, 128, %s6, [#allocation11]
    $region33: #{tpu_custom_call.1} parent=1 // pred_fallthru
      _
    // Predicated region
    $region34: #{tpu_custom_call.1} parent=1 // pred_check
      _
    $region35: #{tpu_custom_call.1} parent=1 // pred_check_branch
      %129 = sbr.rel (0) target = $region37
    $region36: #{tpu_custom_call.1} parent=1 // pred_region
      %s131 = ssub.s32 32, 32
      %132 = vsyncadd [#allocation14], %s131
      %s134 = sshll.u32 [#allocation13], 4
      %s135 = int_to_ptr.vmem [resolvable:$true] %s134
      %137 = dma.vmem_to_hbm [thread:$0]  %s135, 32, %s7, [#allocation14]
    $region37: #{tpu_custom_call.1} parent=1 // pred_fallthru
      _
    // Predicated region
    $region38: #{tpu_custom_call.1} parent=1 // pred_check
      _
    $region39: #{tpu_custom_call.1} parent=1 // pred_check_branch
      %139 = sbr.rel (0) target = $region41
    $region40: #{tpu_custom_call.1} parent=1 // pred_region
      %140 = dma.done [#allocation6], 128
    $region41: #{tpu_custom_call.1} parent=1 // pred_fallthru
      _
    // Predicated region
    $region42: #{tpu_custom_call.1} parent=1 // pred_check
      _
    $region43: #{tpu_custom_call.1} parent=1 // pred_check_branch
      %142 = sbr.rel (0) target = $region45
    $region44: #{tpu_custom_call.1} parent=1 // pred_region
      %143 = dma.done [#allocation11], 32
    $region45: #{tpu_custom_call.1} parent=1 // pred_fallthru
      _
    // Predicated region
    $region46: #{tpu_custom_call.1} parent=1 // pred_check
      _
    $region47: #{tpu_custom_call.1} parent=1 // pred_check_branch
      %145 = sbr.rel (0) target = $region49
    $region48: #{tpu_custom_call.1} parent=1 // pred_region
      %146 = dma.done [#allocation11], 128
    $region49: #{tpu_custom_call.1} parent=1 // pred_fallthru
      _
    // Predicated region
    $region50: #{tpu_custom_call.1} parent=1 // pred_check
      _
    $region51: #{tpu_custom_call.1} parent=1 // pred_check_branch
      %148 = sbr.rel (0) target = $region53
    $region52: #{tpu_custom_call.1} parent=1 // pred_region
      %149 = dma.done [#allocation14], 32
    $region53: #{tpu_custom_call.1} parent=1 // pred_fallthru
      _
    %150 = vsyncpa [#allocation5], 1
    %151 = vsyncpa [#allocation8], 1
    %152 = vsyncpa [#allocation6], 1
    %153 = vsyncpa [#allocation11], 1
    %154 = vsyncpa [#allocation14], 1

</llo_original>
